<compile_context>
chip_gen: v7x
topology: tpu7x:2x2x1
jax: 0.10.0
libtpu: 0.0.40
codegen_flags: <defaults>
</compile_context>

<pallas_src>
import functools

import jax
import jax.numpy as jnp
from jax.experimental import pallas as pl
from jax.experimental.pallas import tpu as pltpu


# ----------------------------------------------------------------------------
# Pallas kernel: pair construction + fused scoring MLP over one batch tile.
# refs layout: (pt, pb, b0, [w1, b1, ..., w_{L-2}, b_{L-2}, w_last_row, b_last], out)
# ----------------------------------------------------------------------------
def _pair_mlp_kernel(pair_indices, n_layers, pt_ref, pb_ref, b0_ref, *refs):
    out_ref = refs[-1]
    params = refs[:-1]
    num_pairs = len(pair_indices)

    pt = pt_ref[...].astype(jnp.float32)      # (F, tb, H1)
    pb = pb_ref[...].astype(jnp.float32)      # (F, tb, H1)
    tb = pt.shape[1]

    # Pair construction on-chip: pair-major, sublane-aligned concat (tb % 8 == 0).
    pieces = [pt[i] + pb[j] for (i, j) in pair_indices]      # each (tb, H1)
    h = jnp.concatenate(pieces, axis=0)                      # (P*tb, H1)
    h = h + b0_ref[...]                                      # layer-0 bias

    if n_layers == 1:
        scores = h.reshape(num_pairs, tb, 1)[:, :, 0]        # (P, tb)
    else:
        h = jnp.maximum(h, 0.0)                              # ReLU after layer 0
        # TODO(synk): dropout is eval-mode identity (dropout=0.0 default); not implemented.
        n_mid = n_layers - 2
        for l in range(n_mid):
            w = params[2 * l][...]                           # (d_in, d_out) bf16
            b = params[2 * l + 1][...]                       # (1, d_out) f32
            h = jnp.dot(h.astype(jnp.bfloat16), w,
                        preferred_element_type=jnp.float32) + b
            h = jnp.maximum(h, 0.0)
        # Final Linear(out=1) as VPU multiply + lane reduce (lane-dense result).
        w_last = params[2 * n_mid][...]                      # (1, d_last) f32
        b_last = params[2 * n_mid + 1][0, 0]                 # scalar
        h3 = h.reshape(num_pairs, tb, h.shape[-1])           # cheap split (tb % 8 == 0)
        scores = jnp.sum(h3 * w_last[None], axis=-1) + b_last  # (P, tb)

    out_ref[0] = scores


def _choose_tb(batch, num_pairs, target_rows=2048):
    """Batch-tile size: multiple of 8, ~target_rows flattened MLP rows per grid step."""
    b8 = ((batch + 7) // 8) * 8
    tb = (max(1, target_rows // num_pairs) // 8) * 8
    tb = max(8, min(tb, b8))
    if b8 >= 128:
        tb = max(tb, 128)          # lane-dense stores once the batch allows it
    return tb


def pair_scores_pallas(proj_top, proj_bot, pair_indices, weights, biases, *, tb):
    """proj_top/proj_bot: (F, B_pad, H1) bf16. Returns (B_pad, P) f32 scores."""
    num_fields, b_pad, h1 = proj_top.shape
    num_pairs = len(pair_indices)
    n_layers = len(weights)
    grid = b_pad // tb

    in_specs = [pl.BlockSpec((num_fields, tb, h1), lambda g: (0, g, 0)),
                pl.BlockSpec((num_fields, tb, h1), lambda g: (0, g, 0))]
    args = [proj_top, proj_bot]

    b0 = biases[0].reshape(1, h1).astype(jnp.float32)
    in_specs.append(pl.BlockSpec(b0.shape, lambda g: (0, 0)))
    args.append(b0)

    for l in range(1, n_layers - 1):                         # middle layers
        w = weights[l].astype(jnp.bfloat16)
        b = biases[l].reshape(1, -1).astype(jnp.float32)
        in_specs += [pl.BlockSpec(w.shape, lambda g: (0, 0)),
                     pl.BlockSpec(b.shape, lambda g: (0, 0))]
        args += [w, b]
    if n_layers > 1:                                         # final layer as row vec + scalar
        w_last = weights[-1].reshape(1, -1).astype(jnp.float32)
        b_last = biases[-1].reshape(1, 1).astype(jnp.float32)
        in_specs += [pl.BlockSpec(w_last.shape, lambda g: (0, 0)),
                     pl.BlockSpec(b_last.shape, lambda g: (0, 0))]
        args += [w_last, b_last]

    out = pl.pallas_call(
        functools.partial(_pair_mlp_kernel, tuple(pair_indices), n_layers),
        out_shape=jax.ShapeDtypeStruct((grid, num_pairs, tb), jnp.float32),
        grid_spec=pltpu.PrefetchScalarGridSpec(
            num_scalar_prefetch=0,
            grid=(grid,),
            in_specs=in_specs,
            out_specs=pl.BlockSpec((1, num_pairs, tb), lambda g: (g, 0, 0)),
        ),
        compiler_params=pltpu.CompilerParams(
            dimension_semantics=("parallel",),
            vmem_limit_bytes=32 * 1024 * 1024,
        ),
    )(*args)
    # (grid, P, tb) pair-major -> (B_pad, P) batch-major
    return out.transpose(0, 2, 1).reshape(b_pad, num_pairs)


# ----------------------------------------------------------------------------
# Parameter init (mirrors nn.Linear + xavier_uniform_ + zero bias)
# ----------------------------------------------------------------------------
def init_params(key, embedding_dim, hidden_dims):
    dims = [embedding_dim * 2] + list(hidden_dims) + [1]
    weights, biases = [], []
    for i in range(len(dims) - 1):
        key, sub = jax.random.split(key)
        fan_in, fan_out = dims[i], dims[i + 1]
        limit = (6.0 / (fan_in + fan_out)) ** 0.5
        w = jax.random.uniform(sub, (fan_in, fan_out), jnp.float32, -limit, limit)
        b = jnp.zeros((1, fan_out), jnp.float32)
        weights.append(w)
        biases.append(b)
    return weights, biases


# ----------------------------------------------------------------------------
# Full forward pass
# ----------------------------------------------------------------------------
def all_pair_scores(embeddings, weights, biases):
    """Scores for every (i, j) field pair. Returns (scores (B, P), pair_arr (P, 2))."""
    bsz, num_fields, emb_dim = embeddings.shape
    pair_indices = tuple((i, j) for i in range(num_fields)
                         for j in range(i + 1, num_fields))
    num_pairs = len(pair_indices)

    # Algebraic split of layer 0: cat(e_i, e_j) @ W0 == e_i @ W0[:E] + e_j @ W0[E:].
    # Project each field ONCE (tiny matmul, plain XLA); pairs are formed in-kernel.
    w0 = weights[0]
    proj_top = jnp.einsum('bfe,eh->bfh', embeddings, w0[:emb_dim]).astype(jnp.bfloat16)
    proj_bot = jnp.einsum('bfe,eh->bfh', embeddings, w0[emb_dim:]).astype(jnp.bfloat16)

    tb = _choose_tb(bsz, num_pairs)
    b_pad = ((bsz + tb - 1) // tb) * tb
    pad = ((0, b_pad - bsz), (0, 0), (0, 0))
    pt = jnp.transpose(jnp.pad(proj_top, pad), (1, 0, 2))    # (F, B_pad, H1)
    pb = jnp.transpose(jnp.pad(proj_bot, pad), (1, 0, 2))

    scores = pair_scores_pallas(pt, pb, pair_indices, weights, biases, tb=tb)[:bsz]
    pair_arr = jnp.array(pair_indices, dtype=jnp.int32)      # (P, 2)
    return scores, pair_arr


@functools.partial(jax.jit, static_argnums=(3,))
def feature_interaction_detector(embeddings, weights, biases, num_interactions):
    """Returns (selected_scores (B, K), selected_pairs (K, 2))."""
    scores, pair_arr = all_pair_scores(embeddings, weights, biases)
    num_pairs = pair_arr.shape[0]
    if num_interactions >= num_pairs:
        return scores, pair_arr
    _, topk_idx = jax.lax.top_k(scores.mean(axis=0), num_interactions)
    selected_scores = jnp.take(scores, topk_idx, axis=1)     # (B, K)
    selected_pairs = pair_arr[topk_idx]                      # (K, 2)
    return selected_scores, selected_pairs


# ----------------------------------------------------------------------------
# Pure-JAX reference (f32) for a numerical sanity check
# ----------------------------------------------------------------------------
def _reference_scores(embeddings, weights, biases):
    bsz, num_fields, emb_dim = embeddings.shape
    pair_indices = [(i, j) for i in range(num_fields) for j in range(i + 1, num_fields)]
    pe = jnp.stack([jnp.concatenate([embeddings[:, i], embeddings[:, j]], axis=1)
                    for (i, j) in pair_indices], axis=1)     # (B, P, 2E)
    h = pe.reshape(-1, 2 * emb_dim)
    n_layers = len(weights)
    for l in range(n_layers):
        h = h @ weights[l] + biases[l]
        if l < n_layers - 1:
            h = jnp.maximum(h, 0.0)
    return h.reshape(bsz, len(pair_indices))


if __name__ == "__main__":
    key = jax.random.PRNGKey(0)

    batch_size = 2
    num_fields = 8
    embedding_dim = 16
    hidden_dims = [32, 16]
    num_interactions = 10

    k_emb, k_params = jax.random.split(key)
    embeddings = jax.random.normal(
        k_emb, (batch_size, num_fields, embedding_dim), dtype=jnp.float32)
    weights, biases = init_params(k_params, embedding_dim, hidden_dims)

    sel_scores, sel_pairs = feature_interaction_detector(
        embeddings, weights, biases, num_interactions)
    jax.block_until_ready((sel_scores, sel_pairs))

    assert sel_scores.shape == (batch_size, num_interactions)
    assert sel_pairs.shape == (num_interactions, 2)

    # Numerical sanity vs pure-JAX reference (kernel uses bf16 matmuls -> loose tol).
    got, _ = all_pair_scores(embeddings, weights, biases)
    want = _reference_scores(embeddings, weights, biases)
    jax.block_until_ready((got, want))
    assert jnp.allclose(got, want, atol=0.15, rtol=0.05), \
        float(jnp.max(jnp.abs(got - want)))

    print("KERNEL_OK")
</pallas_src>

<mosaic_0001>
module attributes {stable_mosaic.version = 11 : i64} {
  func.func @_pair_mlp_kernel(%arg0: i32, %arg1: memref<8x8x32xbf16, #tpu.memory_space<vmem>>, %arg2: memref<8x8x32xbf16, #tpu.memory_space<vmem>>, %arg3: memref<1x32xf32, #tpu.memory_space<vmem>>, %arg4: memref<32x16xbf16, #tpu.memory_space<vmem>>, %arg5: memref<1x16xf32, #tpu.memory_space<vmem>>, %arg6: memref<1x16xf32, #tpu.memory_space<vmem>>, %arg7: memref<1x1xf32, #tpu.memory_space<vmem>>, %arg8: memref<1x28x8xf32, #tpu.memory_space<vmem>>) attributes {dimension_semantics = [#tpu.dimension_semantics<parallel>], iteration_bounds = array<i64: 1>, scalar_prefetch = 0 : i64, scratch_operands = 0 : i64, tpu.core_type = #tpu.core_type<tc>, window_params = [{transform_indices = @transform_0, window_bounds = array<i64: 8, 8, 32>}, {transform_indices = @transform_1, window_bounds = array<i64: 8, 8, 32>}, {pipeline_mode = #tpu.pipeline_mode<synchronous>, transform_indices = @transform_2, window_bounds = array<i64: 1, 32>}, {pipeline_mode = #tpu.pipeline_mode<synchronous>, transform_indices = @transform_3, window_bounds = array<i64: 32, 16>}, {pipeline_mode = #tpu.pipeline_mode<synchronous>, transform_indices = @transform_4, window_bounds = array<i64: 1, 16>}, {pipeline_mode = #tpu.pipeline_mode<synchronous>, transform_indices = @transform_5, window_bounds = array<i64: 1, 16>}, {pipeline_mode = #tpu.pipeline_mode<synchronous>, transform_indices = @transform_6, window_bounds = array<i64: 1, 1>}, {transform_indices = @transform_7, window_bounds = array<i64: 1, 28, 8>}]} {
    %c0 = arith.constant 0 : index
    %c0_0 = arith.constant 0 : index
    %c0_1 = arith.constant 0 : index
    %0 = vector.load %arg1[%c0, %c0_0, %c0_1] : memref<8x8x32xbf16, #tpu.memory_space<vmem>>, vector<8x8x32xbf16>
    %1 = arith.extf %0 : vector<8x8x32xbf16> to vector<8x8x32xf32>
    %c0_2 = arith.constant 0 : index
    %c0_3 = arith.constant 0 : index
    %c0_4 = arith.constant 0 : index
    %2 = vector.load %arg2[%c0_2, %c0_3, %c0_4] : memref<8x8x32xbf16, #tpu.memory_space<vmem>>, vector<8x8x32xbf16>
    %3 = arith.extf %2 : vector<8x8x32xbf16> to vector<8x8x32xf32>
    %4 = vector.extract_strided_slice %1 {offsets = [0, 0, 0], sizes = [1, 8, 32], strides = [1, 1, 1]} : vector<8x8x32xf32> to vector<1x8x32xf32>
    %5 = vector.shape_cast %4 : vector<1x8x32xf32> to vector<8x32xf32>
    %6 = vector.extract_strided_slice %3 {offsets = [1, 0, 0], sizes = [1, 8, 32], strides = [1, 1, 1]} : vector<8x8x32xf32> to vector<1x8x32xf32>
    %7 = vector.shape_cast %6 : vector<1x8x32xf32> to vector<8x32xf32>
    %8 = arith.addf %5, %7 : vector<8x32xf32>
    %9 = vector.extract_strided_slice %1 {offsets = [0, 0, 0], sizes = [1, 8, 32], strides = [1, 1, 1]} : vector<8x8x32xf32> to vector<1x8x32xf32>
    %10 = vector.shape_cast %9 : vector<1x8x32xf32> to vector<8x32xf32>
    %11 = vector.extract_strided_slice %3 {offsets = [2, 0, 0], sizes = [1, 8, 32], strides = [1, 1, 1]} : vector<8x8x32xf32> to vector<1x8x32xf32>
    %12 = vector.shape_cast %11 : vector<1x8x32xf32> to vector<8x32xf32>
    %13 = arith.addf %10, %12 : vector<8x32xf32>
    %14 = vector.extract_strided_slice %1 {offsets = [0, 0, 0], sizes = [1, 8, 32], strides = [1, 1, 1]} : vector<8x8x32xf32> to vector<1x8x32xf32>
    %15 = vector.shape_cast %14 : vector<1x8x32xf32> to vector<8x32xf32>
    %16 = vector.extract_strided_slice %3 {offsets = [3, 0, 0], sizes = [1, 8, 32], strides = [1, 1, 1]} : vector<8x8x32xf32> to vector<1x8x32xf32>
    %17 = vector.shape_cast %16 : vector<1x8x32xf32> to vector<8x32xf32>
    %18 = arith.addf %15, %17 : vector<8x32xf32>
    %19 = vector.extract_strided_slice %1 {offsets = [0, 0, 0], sizes = [1, 8, 32], strides = [1, 1, 1]} : vector<8x8x32xf32> to vector<1x8x32xf32>
    %20 = vector.shape_cast %19 : vector<1x8x32xf32> to vector<8x32xf32>
    %21 = vector.extract_strided_slice %3 {offsets = [4, 0, 0], sizes = [1, 8, 32], strides = [1, 1, 1]} : vector<8x8x32xf32> to vector<1x8x32xf32>
    %22 = vector.shape_cast %21 : vector<1x8x32xf32> to vector<8x32xf32>
    %23 = arith.addf %20, %22 : vector<8x32xf32>
    %24 = vector.extract_strided_slice %1 {offsets = [0, 0, 0], sizes = [1, 8, 32], strides = [1, 1, 1]} : vector<8x8x32xf32> to vector<1x8x32xf32>
    %25 = vector.shape_cast %24 : vector<1x8x32xf32> to vector<8x32xf32>
    %26 = vector.extract_strided_slice %3 {offsets = [5, 0, 0], sizes = [1, 8, 32], strides = [1, 1, 1]} : vector<8x8x32xf32> to vector<1x8x32xf32>
    %27 = vector.shape_cast %26 : vector<1x8x32xf32> to vector<8x32xf32>
    %28 = arith.addf %25, %27 : vector<8x32xf32>
    %29 = vector.extract_strided_slice %1 {offsets = [0, 0, 0], sizes = [1, 8, 32], strides = [1, 1, 1]} : vector<8x8x32xf32> to vector<1x8x32xf32>
    %30 = vector.shape_cast %29 : vector<1x8x32xf32> to vector<8x32xf32>
    %31 = vector.extract_strided_slice %3 {offsets = [6, 0, 0], sizes = [1, 8, 32], strides = [1, 1, 1]} : vector<8x8x32xf32> to vector<1x8x32xf32>
    %32 = vector.shape_cast %31 : vector<1x8x32xf32> to vector<8x32xf32>
    %33 = arith.addf %30, %32 : vector<8x32xf32>
    %34 = vector.extract_strided_slice %1 {offsets = [0, 0, 0], sizes = [1, 8, 32], strides = [1, 1, 1]} : vector<8x8x32xf32> to vector<1x8x32xf32>
    %35 = vector.shape_cast %34 : vector<1x8x32xf32> to vector<8x32xf32>
    %36 = vector.extract_strided_slice %3 {offsets = [7, 0, 0], sizes = [1, 8, 32], strides = [1, 1, 1]} : vector<8x8x32xf32> to vector<1x8x32xf32>
    %37 = vector.shape_cast %36 : vector<1x8x32xf32> to vector<8x32xf32>
    %38 = arith.addf %35, %37 : vector<8x32xf32>
    %39 = vector.extract_strided_slice %1 {offsets = [1, 0, 0], sizes = [1, 8, 32], strides = [1, 1, 1]} : vector<8x8x32xf32> to vector<1x8x32xf32>
    %40 = vector.shape_cast %39 : vector<1x8x32xf32> to vector<8x32xf32>
    %41 = vector.extract_strided_slice %3 {offsets = [2, 0, 0], sizes = [1, 8, 32], strides = [1, 1, 1]} : vector<8x8x32xf32> to vector<1x8x32xf32>
    %42 = vector.shape_cast %41 : vector<1x8x32xf32> to vector<8x32xf32>
    %43 = arith.addf %40, %42 : vector<8x32xf32>
    %44 = vector.extract_strided_slice %1 {offsets = [1, 0, 0], sizes = [1, 8, 32], strides = [1, 1, 1]} : vector<8x8x32xf32> to vector<1x8x32xf32>
    %45 = vector.shape_cast %44 : vector<1x8x32xf32> to vector<8x32xf32>
    %46 = vector.extract_strided_slice %3 {offsets = [3, 0, 0], sizes = [1, 8, 32], strides = [1, 1, 1]} : vector<8x8x32xf32> to vector<1x8x32xf32>
    %47 = vector.shape_cast %46 : vector<1x8x32xf32> to vector<8x32xf32>
    %48 = arith.addf %45, %47 : vector<8x32xf32>
    %49 = vector.extract_strided_slice %1 {offsets = [1, 0, 0], sizes = [1, 8, 32], strides = [1, 1, 1]} : vector<8x8x32xf32> to vector<1x8x32xf32>
    %50 = vector.shape_cast %49 : vector<1x8x32xf32> to vector<8x32xf32>
    %51 = vector.extract_strided_slice %3 {offsets = [4, 0, 0], sizes = [1, 8, 32], strides = [1, 1, 1]} : vector<8x8x32xf32> to vector<1x8x32xf32>
    %52 = vector.shape_cast %51 : vector<1x8x32xf32> to vector<8x32xf32>
    %53 = arith.addf %50, %52 : vector<8x32xf32>
    %54 = vector.extract_strided_slice %1 {offsets = [1, 0, 0], sizes = [1, 8, 32], strides = [1, 1, 1]} : vector<8x8x32xf32> to vector<1x8x32xf32>
    %55 = vector.shape_cast %54 : vector<1x8x32xf32> to vector<8x32xf32>
    %56 = vector.extract_strided_slice %3 {offsets = [5, 0, 0], sizes = [1, 8, 32], strides = [1, 1, 1]} : vector<8x8x32xf32> to vector<1x8x32xf32>
    %57 = vector.shape_cast %56 : vector<1x8x32xf32> to vector<8x32xf32>
    %58 = arith.addf %55, %57 : vector<8x32xf32>
    %59 = vector.extract_strided_slice %1 {offsets = [1, 0, 0], sizes = [1, 8, 32], strides = [1, 1, 1]} : vector<8x8x32xf32> to vector<1x8x32xf32>
    %60 = vector.shape_cast %59 : vector<1x8x32xf32> to vector<8x32xf32>
    %61 = vector.extract_strided_slice %3 {offsets = [6, 0, 0], sizes = [1, 8, 32], strides = [1, 1, 1]} : vector<8x8x32xf32> to vector<1x8x32xf32>
    %62 = vector.shape_cast %61 : vector<1x8x32xf32> to vector<8x32xf32>
    %63 = arith.addf %60, %62 : vector<8x32xf32>
    %64 = vector.extract_strided_slice %1 {offsets = [1, 0, 0], sizes = [1, 8, 32], strides = [1, 1, 1]} : vector<8x8x32xf32> to vector<1x8x32xf32>
    %65 = vector.shape_cast %64 : vector<1x8x32xf32> to vector<8x32xf32>
    %66 = vector.extract_strided_slice %3 {offsets = [7, 0, 0], sizes = [1, 8, 32], strides = [1, 1, 1]} : vector<8x8x32xf32> to vector<1x8x32xf32>
    %67 = vector.shape_cast %66 : vector<1x8x32xf32> to vector<8x32xf32>
    %68 = arith.addf %65, %67 : vector<8x32xf32>
    %69 = vector.extract_strided_slice %1 {offsets = [2, 0, 0], sizes = [1, 8, 32], strides = [1, 1, 1]} : vector<8x8x32xf32> to vector<1x8x32xf32>
    %70 = vector.shape_cast %69 : vector<1x8x32xf32> to vector<8x32xf32>
    %71 = vector.extract_strided_slice %3 {offsets = [3, 0, 0], sizes = [1, 8, 32], strides = [1, 1, 1]} : vector<8x8x32xf32> to vector<1x8x32xf32>
    %72 = vector.shape_cast %71 : vector<1x8x32xf32> to vector<8x32xf32>
    %73 = arith.addf %70, %72 : vector<8x32xf32>
    %74 = vector.extract_strided_slice %1 {offsets = [2, 0, 0], sizes = [1, 8, 32], strides = [1, 1, 1]} : vector<8x8x32xf32> to vector<1x8x32xf32>
    %75 = vector.shape_cast %74 : vector<1x8x32xf32> to vector<8x32xf32>
    %76 = vector.extract_strided_slice %3 {offsets = [4, 0, 0], sizes = [1, 8, 32], strides = [1, 1, 1]} : vector<8x8x32xf32> to vector<1x8x32xf32>
    %77 = vector.shape_cast %76 : vector<1x8x32xf32> to vector<8x32xf32>
    %78 = arith.addf %75, %77 : vector<8x32xf32>
    %79 = vector.extract_strided_slice %1 {offsets = [2, 0, 0], sizes = [1, 8, 32], strides = [1, 1, 1]} : vector<8x8x32xf32> to vector<1x8x32xf32>
    %80 = vector.shape_cast %79 : vector<1x8x32xf32> to vector<8x32xf32>
    %81 = vector.extract_strided_slice %3 {offsets = [5, 0, 0], sizes = [1, 8, 32], strides = [1, 1, 1]} : vector<8x8x32xf32> to vector<1x8x32xf32>
    %82 = vector.shape_cast %81 : vector<1x8x32xf32> to vector<8x32xf32>
    %83 = arith.addf %80, %82 : vector<8x32xf32>
    %84 = vector.extract_strided_slice %1 {offsets = [2, 0, 0], sizes = [1, 8, 32], strides = [1, 1, 1]} : vector<8x8x32xf32> to vector<1x8x32xf32>
    %85 = vector.shape_cast %84 : vector<1x8x32xf32> to vector<8x32xf32>
    %86 = vector.extract_strided_slice %3 {offsets = [6, 0, 0], sizes = [1, 8, 32], strides = [1, 1, 1]} : vector<8x8x32xf32> to vector<1x8x32xf32>
    %87 = vector.shape_cast %86 : vector<1x8x32xf32> to vector<8x32xf32>
    %88 = arith.addf %85, %87 : vector<8x32xf32>
    %89 = vector.extract_strided_slice %1 {offsets = [2, 0, 0], sizes = [1, 8, 32], strides = [1, 1, 1]} : vector<8x8x32xf32> to vector<1x8x32xf32>
    %90 = vector.shape_cast %89 : vector<1x8x32xf32> to vector<8x32xf32>
    %91 = vector.extract_strided_slice %3 {offsets = [7, 0, 0], sizes = [1, 8, 32], strides = [1, 1, 1]} : vector<8x8x32xf32> to vector<1x8x32xf32>
    %92 = vector.shape_cast %91 : vector<1x8x32xf32> to vector<8x32xf32>
    %93 = arith.addf %90, %92 : vector<8x32xf32>
    %94 = vector.extract_strided_slice %1 {offsets = [3, 0, 0], sizes = [1, 8, 32], strides = [1, 1, 1]} : vector<8x8x32xf32> to vector<1x8x32xf32>
    %95 = vector.shape_cast %94 : vector<1x8x32xf32> to vector<8x32xf32>
    %96 = vector.extract_strided_slice %3 {offsets = [4, 0, 0], sizes = [1, 8, 32], strides = [1, 1, 1]} : vector<8x8x32xf32> to vector<1x8x32xf32>
    %97 = vector.shape_cast %96 : vector<1x8x32xf32> to vector<8x32xf32>
    %98 = arith.addf %95, %97 : vector<8x32xf32>
    %99 = vector.extract_strided_slice %1 {offsets = [3, 0, 0], sizes = [1, 8, 32], strides = [1, 1, 1]} : vector<8x8x32xf32> to vector<1x8x32xf32>
    %100 = vector.shape_cast %99 : vector<1x8x32xf32> to vector<8x32xf32>
    %101 = vector.extract_strided_slice %3 {offsets = [5, 0, 0], sizes = [1, 8, 32], strides = [1, 1, 1]} : vector<8x8x32xf32> to vector<1x8x32xf32>
    %102 = vector.shape_cast %101 : vector<1x8x32xf32> to vector<8x32xf32>
    %103 = arith.addf %100, %102 : vector<8x32xf32>
    %104 = vector.extract_strided_slice %1 {offsets = [3, 0, 0], sizes = [1, 8, 32], strides = [1, 1, 1]} : vector<8x8x32xf32> to vector<1x8x32xf32>
    %105 = vector.shape_cast %104 : vector<1x8x32xf32> to vector<8x32xf32>
    %106 = vector.extract_strided_slice %3 {offsets = [6, 0, 0], sizes = [1, 8, 32], strides = [1, 1, 1]} : vector<8x8x32xf32> to vector<1x8x32xf32>
    %107 = vector.shape_cast %106 : vector<1x8x32xf32> to vector<8x32xf32>
    %108 = arith.addf %105, %107 : vector<8x32xf32>
    %109 = vector.extract_strided_slice %1 {offsets = [3, 0, 0], sizes = [1, 8, 32], strides = [1, 1, 1]} : vector<8x8x32xf32> to vector<1x8x32xf32>
    %110 = vector.shape_cast %109 : vector<1x8x32xf32> to vector<8x32xf32>
    %111 = vector.extract_strided_slice %3 {offsets = [7, 0, 0], sizes = [1, 8, 32], strides = [1, 1, 1]} : vector<8x8x32xf32> to vector<1x8x32xf32>
    %112 = vector.shape_cast %111 : vector<1x8x32xf32> to vector<8x32xf32>
    %113 = arith.addf %110, %112 : vector<8x32xf32>
    %114 = vector.extract_strided_slice %1 {offsets = [4, 0, 0], sizes = [1, 8, 32], strides = [1, 1, 1]} : vector<8x8x32xf32> to vector<1x8x32xf32>
    %115 = vector.shape_cast %114 : vector<1x8x32xf32> to vector<8x32xf32>
    %116 = vector.extract_strided_slice %3 {offsets = [5, 0, 0], sizes = [1, 8, 32], strides = [1, 1, 1]} : vector<8x8x32xf32> to vector<1x8x32xf32>
    %117 = vector.shape_cast %116 : vector<1x8x32xf32> to vector<8x32xf32>
    %118 = arith.addf %115, %117 : vector<8x32xf32>
    %119 = vector.extract_strided_slice %1 {offsets = [4, 0, 0], sizes = [1, 8, 32], strides = [1, 1, 1]} : vector<8x8x32xf32> to vector<1x8x32xf32>
    %120 = vector.shape_cast %119 : vector<1x8x32xf32> to vector<8x32xf32>
    %121 = vector.extract_strided_slice %3 {offsets = [6, 0, 0], sizes = [1, 8, 32], strides = [1, 1, 1]} : vector<8x8x32xf32> to vector<1x8x32xf32>
    %122 = vector.shape_cast %121 : vector<1x8x32xf32> to vector<8x32xf32>
    %123 = arith.addf %120, %122 : vector<8x32xf32>
    %124 = vector.extract_strided_slice %1 {offsets = [4, 0, 0], sizes = [1, 8, 32], strides = [1, 1, 1]} : vector<8x8x32xf32> to vector<1x8x32xf32>
    %125 = vector.shape_cast %124 : vector<1x8x32xf32> to vector<8x32xf32>
    %126 = vector.extract_strided_slice %3 {offsets = [7, 0, 0], sizes = [1, 8, 32], strides = [1, 1, 1]} : vector<8x8x32xf32> to vector<1x8x32xf32>
    %127 = vector.shape_cast %126 : vector<1x8x32xf32> to vector<8x32xf32>
    %128 = arith.addf %125, %127 : vector<8x32xf32>
    %129 = vector.extract_strided_slice %1 {offsets = [5, 0, 0], sizes = [1, 8, 32], strides = [1, 1, 1]} : vector<8x8x32xf32> to vector<1x8x32xf32>
    %130 = vector.shape_cast %129 : vector<1x8x32xf32> to vector<8x32xf32>
    %131 = vector.extract_strided_slice %3 {offsets = [6, 0, 0], sizes = [1, 8, 32], strides = [1, 1, 1]} : vector<8x8x32xf32> to vector<1x8x32xf32>
    %132 = vector.shape_cast %131 : vector<1x8x32xf32> to vector<8x32xf32>
    %133 = arith.addf %130, %132 : vector<8x32xf32>
    %134 = vector.extract_strided_slice %1 {offsets = [5, 0, 0], sizes = [1, 8, 32], strides = [1, 1, 1]} : vector<8x8x32xf32> to vector<1x8x32xf32>
    %135 = vector.shape_cast %134 : vector<1x8x32xf32> to vector<8x32xf32>
    %136 = vector.extract_strided_slice %3 {offsets = [7, 0, 0], sizes = [1, 8, 32], strides = [1, 1, 1]} : vector<8x8x32xf32> to vector<1x8x32xf32>
    %137 = vector.shape_cast %136 : vector<1x8x32xf32> to vector<8x32xf32>
    %138 = arith.addf %135, %137 : vector<8x32xf32>
    %139 = vector.extract_strided_slice %1 {offsets = [6, 0, 0], sizes = [1, 8, 32], strides = [1, 1, 1]} : vector<8x8x32xf32> to vector<1x8x32xf32>
    %140 = vector.shape_cast %139 : vector<1x8x32xf32> to vector<8x32xf32>
    %141 = vector.extract_strided_slice %3 {offsets = [7, 0, 0], sizes = [1, 8, 32], strides = [1, 1, 1]} : vector<8x8x32xf32> to vector<1x8x32xf32>
    %142 = vector.shape_cast %141 : vector<1x8x32xf32> to vector<8x32xf32>
    %143 = arith.addf %140, %142 : vector<8x32xf32>
    %144 = tpu.concatenate %8, %13, %18, %23, %28, %33, %38, %43, %48, %53, %58, %63, %68, %73, %78, %83 in 0 : vector<8x32xf32>, vector<8x32xf32>, vector<8x32xf32>, vector<8x32xf32>, vector<8x32xf32>, vector<8x32xf32>, vector<8x32xf32>, vector<8x32xf32>, vector<8x32xf32>, vector<8x32xf32>, vector<8x32xf32>, vector<8x32xf32>, vector<8x32xf32>, vector<8x32xf32>, vector<8x32xf32>, vector<8x32xf32> -> vector<128x32xf32>
    %145 = tpu.concatenate %88, %93, %98, %103, %108, %113, %118, %123, %128, %133, %138, %143 in 0 : vector<8x32xf32>, vector<8x32xf32>, vector<8x32xf32>, vector<8x32xf32>, vector<8x32xf32>, vector<8x32xf32>, vector<8x32xf32>, vector<8x32xf32>, vector<8x32xf32>, vector<8x32xf32>, vector<8x32xf32>, vector<8x32xf32> -> vector<96x32xf32>
    %146 = tpu.concatenate %144, %145 in 0 : vector<128x32xf32>, vector<96x32xf32> -> vector<224x32xf32>
    %c0_5 = arith.constant 0 : index
    %c0_6 = arith.constant 0 : index
    %147 = vector.load %arg3[%c0_5, %c0_6] : memref<1x32xf32, #tpu.memory_space<vmem>>, vector<1x32xf32>
    %148 = vector.broadcast %147 : vector<1x32xf32> to vector<224x32xf32>
    %149 = arith.addf %146, %148 : vector<224x32xf32>
    %cst = arith.constant 0.000000e+00 : f32
    %150 = vector.broadcast %cst : f32 to vector<224x32xf32>
    %151 = arith.maximumf %149, %150 : vector<224x32xf32>
    %c0_7 = arith.constant 0 : index
    %c0_8 = arith.constant 0 : index
    %152 = vector.load %arg4[%c0_7, %c0_8] : memref<32x16xbf16, #tpu.memory_space<vmem>>, vector<32x16xbf16>
    %c0_9 = arith.constant 0 : index
    %c0_10 = arith.constant 0 : index
    %153 = vector.load %arg5[%c0_9, %c0_10] : memref<1x16xf32, #tpu.memory_space<vmem>>, vector<1x16xf32>
    %154 = arith.truncf %151 : vector<224x32xf32> to vector<224x32xbf16>
    %cst_11 = arith.constant dense<0.000000e+00> : vector<224x16xf32>
    %155 = tpu.matmul %154, %152, %cst_11 {dimension_numbers = #tpu.dot_dimension_numbers<[1], [0], [0], [1], [0, 0, 1, 1], [], []>} : vector<224x32xbf16>, vector<32x16xbf16>, vector<224x16xf32> -> vector<224x16xf32>
    %156 = vector.broadcast %153 : vector<1x16xf32> to vector<224x16xf32>
    %157 = arith.addf %155, %156 : vector<224x16xf32>
    %cst_12 = arith.constant 0.000000e+00 : f32
    %158 = vector.broadcast %cst_12 : f32 to vector<224x16xf32>
    %159 = arith.maximumf %157, %158 : vector<224x16xf32>
    %c0_13 = arith.constant 0 : index
    %c0_14 = arith.constant 0 : index
    %160 = vector.load %arg6[%c0_13, %c0_14] : memref<1x16xf32, #tpu.memory_space<vmem>>, vector<1x16xf32>
    %c0_15 = arith.constant 0 : index
    %c0_16 = arith.constant 0 : index
    %161 = vector.load %arg7[%c0_15, %c0_16] : memref<1x1xf32, #tpu.memory_space<vmem>>, vector<1x1xf32>
    %162 = vector.extract %161[0, 0] : f32 from vector<1x1xf32>
    %163 = vector.shape_cast %159 : vector<224x16xf32> to vector<28x8x16xf32>
    %164 = vector.shape_cast %160 : vector<1x16xf32> to vector<1x1x16xf32>
    %165 = vector.broadcast %164 : vector<1x1x16xf32> to vector<28x8x16xf32>
    %166 = arith.mulf %163, %165 : vector<28x8x16xf32>
    %cst_17 = arith.constant dense<0.000000e+00> : vector<28x8xf32>
    %167 = vector.multi_reduction <add>, %166, %cst_17 [2] : vector<28x8x16xf32> to vector<28x8xf32>
    %168 = vector.broadcast %162 : f32 to vector<28x8xf32>
    %169 = arith.addf %167, %168 : vector<28x8xf32>
    %c0_18 = arith.constant 0 : index
    %c0_19 = arith.constant 0 : index
    %c0_20 = arith.constant 0 : index
    %170 = vector.load %arg8[%c0_18, %c0_19, %c0_20] : memref<1x28x8xf32, #tpu.memory_space<vmem>>, vector<1x28x8xf32>
    %171 = vector.shape_cast %170 : vector<1x28x8xf32> to vector<28x8xf32>
    %172 = vector.shape_cast %169 : vector<28x8xf32> to vector<1x28x8xf32>
    tpu.vector_store %arg8[%c0_18, %c0_19, %c0_20], %172 {strides = array<i32>} : memref<1x28x8xf32, #tpu.memory_space<vmem>>, vector<1x28x8xf32>,
    return
  }
  func.func @transform_0(%arg0: i32) -> (i32, i32, i32) {
    %c0_i32 = arith.constant 0 : i32
    %c0_i32_0 = arith.constant 0 : i32
    %c0_i32_1 = arith.constant 0 : i32
    return %c0_i32, %arg0, %c0_i32_0 : i32, i32, i32
  }
  func.func @transform_1(%arg0: i32) -> (i32, i32, i32) {
    %c0_i32 = arith.constant 0 : i32
    %c0_i32_0 = arith.constant 0 : i32
    %c0_i32_1 = arith.constant 0 : i32
    return %c0_i32, %arg0, %c0_i32_0 : i32, i32, i32
  }
  func.func @transform_2(%arg0: i32) -> (i32, i32) {
    %c0_i32 = arith.constant 0 : i32
    %c0_i32_0 = arith.constant 0 : i32
    %c0_i32_1 = arith.constant 0 : i32
    return %c0_i32, %c0_i32_0 : i32, i32
  }
  func.func @transform_3(%arg0: i32) -> (i32, i32) {
    %c0_i32 = arith.constant 0 : i32
    %c0_i32_0 = arith.constant 0 : i32
    %c0_i32_1 = arith.constant 0 : i32
    return %c0_i32, %c0_i32_0 : i32, i32
  }
  func.func @transform_4(%arg0: i32) -> (i32, i32) {
    %c0_i32 = arith.constant 0 : i32
    %c0_i32_0 = arith.constant 0 : i32
    %c0_i32_1 = arith.constant 0 : i32
    return %c0_i32, %c0_i32_0 : i32, i32
  }
  func.func @transform_5(%arg0: i32) -> (i32, i32) {
    %c0_i32 = arith.constant 0 : i32
    %c0_i32_0 = arith.constant 0 : i32
    %c0_i32_1 = arith.constant 0 : i32
    return %c0_i32, %c0_i32_0 : i32, i32
  }
  func.func @transform_6(%arg0: i32) -> (i32, i32) {
    %c0_i32 = arith.constant 0 : i32
    %c0_i32_0 = arith.constant 0 : i32
    %c0_i32_1 = arith.constant 0 : i32
    return %c0_i32, %c0_i32_0 : i32, i32
  }
  func.func @transform_7(%arg0: i32) -> (i32, i32, i32) {
    %c0_i32 = arith.constant 0 : i32
    %c0_i32_0 = arith.constant 0 : i32
    %c0_i32_1 = arith.constant 0 : i32
    return %arg0, %c0_i32, %c0_i32_0 : i32, i32, i32
  }
}

</mosaic_0001>

<llo_original>
// kernel: feature_interaction_detector.1
$region0: #{feature_interaction_detector.1}
  #allocation0 [shape = 'u32[]', space=smem, size = 0x4, offset = 0x4, fixed_abs, tag = 'smem constant byte address 0x4 - core index']
  #allocation1 [shape = 'u32[144,128]{1,0:T(1,128)}', space=vmem, size = 0x12000, scoped, tag = 'internal scratch']
  #allocation2 [shape = 'f32[1,1]{1,0:T(1,128)S(1)}', space=vmem, size = 0x200, scoped, tag = 'scoped memory for feature_interaction_detector.1']
  %s0 = inlined_call_operand.vmem [shape: bf16[8,8,32], index: 0, kind: input, shape index: {}]
  %s1 = inlined_call_operand.vmem [shape: bf16[8,8,32], index: 1, kind: input, shape index: {}]
  %s2 = inlined_call_operand.vmem [shape: f32[1,32], index: 2, kind: input, shape index: {}]
  %s3 = inlined_call_operand.vmem [shape: bf16[32,16], index: 3, kind: input, shape index: {}]
  %s4 = inlined_call_operand.vmem [shape: f32[1,16], index: 4, kind: input, shape index: {}]
  %s5 = inlined_call_operand.vmem [shape: f32[1,16], index: 5, kind: input, shape index: {}]
  %s6 = inlined_call_operand.<no memory space> [shape: f32[1,1], index: 6, kind: input, shape index: {}]
  %s7 = inlined_call_operand.vmem [shape: f32[1,28,8], index: 7, kind: output, shape index: {}]
  %s8 = sld [smem:[#allocation0]]
  $region38: #{feature_interaction_detector.1} parent=0
    _
  %s10 = ssub.s32 1, %s8
  %s11 = scalar_select 0, %s10, %s8
  %v12 = vstv %s6
  %13 = vst [vmem:[#allocation2] sm:$0x1] %v12
  // Predicated region
  $region2: #{feature_interaction_detector.1} parent=0 // pred_check
    _
  $region3: #{feature_interaction_detector.1} parent=0 // pred_check_branch
    %15 = sbr.rel (0) target = $region5
  $region4: #{feature_interaction_detector.1} parent=0 // pred_region
    _
  $region5: #{feature_interaction_detector.1} parent=0 // pred_fallthru
    _
  // Predicated region
  $region6: #{feature_interaction_detector.1} parent=0 // pred_check
    _
  $region7: #{feature_interaction_detector.1} parent=0 // pred_check_branch
    %17 = sbr.rel (0) target = $region9
  $region8: #{feature_interaction_detector.1} parent=0 // pred_region
    _
  $region9: #{feature_interaction_detector.1} parent=0 // pred_fallthru
    _
  // Predicated region
  $region10: #{feature_interaction_detector.1} parent=0 // pred_check
    _
  $region11: #{feature_interaction_detector.1} parent=0 // pred_check_branch
    %19 = sbr.rel (0) target = $region13
  $region12: #{feature_interaction_detector.1} parent=0 // pred_region
    _
  $region13: #{feature_interaction_detector.1} parent=0 // pred_fallthru
    _
  // Predicated region
  $region14: #{feature_interaction_detector.1} parent=0 // pred_check
    _
  $region15: #{feature_interaction_detector.1} parent=0 // pred_check_branch
    %21 = sbr.rel (0) target = $region17
  $region16: #{feature_interaction_detector.1} parent=0 // pred_region
    _
  $region17: #{feature_interaction_detector.1} parent=0 // pred_fallthru
    _
  // Predicated region
  $region18: #{feature_interaction_detector.1} parent=0 // pred_check
    _
  $region19: #{feature_interaction_detector.1} parent=0 // pred_check_branch
    %23 = sbr.rel (0) target = $region21
  $region20: #{feature_interaction_detector.1} parent=0 // pred_region
    _
  $region21: #{feature_interaction_detector.1} parent=0 // pred_fallthru
    _
  // Predicated region
  $region22: #{feature_interaction_detector.1} parent=0 // pred_check
    _
  $region23: #{feature_interaction_detector.1} parent=0 // pred_check_branch
    %25 = sbr.rel (0) target = $region25
  $region24: #{feature_interaction_detector.1} parent=0 // pred_region
    _
  $region25: #{feature_interaction_detector.1} parent=0 // pred_fallthru
    _
  // Predicated region
  $region26: #{feature_interaction_detector.1} parent=0 // pred_check
    _
  $region27: #{feature_interaction_detector.1} parent=0 // pred_check_branch
    %27 = sbr.rel (0) target = $region29
  $region28: #{feature_interaction_detector.1} parent=0 // pred_region
    _
  $region29: #{feature_interaction_detector.1} parent=0 // pred_fallthru
    _
  %v29 = vld [vmem:[%s0] sm:$0xf]
  %v30 = vld [vmem:[%s0 + $0x4] sm:$0xf]
  %v31 = vld [vmem:[%s0 + $0x8] sm:$0xf]
  %v32 = vld [vmem:[%s0 + $0xc] sm:$0xf]
  %v33 = vld [vmem:[%s0 + $0x10] sm:$0xf]
  %v34 = vld [vmem:[%s0 + $0x14] sm:$0xf]
  %v35 = vld [vmem:[%s0 + $0x18] sm:$0xf]
  %v36 = vunpack.c.l.bf16 %v29
  %v37 = vunpack.c.l.bf16 %v30
  %v38 = vunpack.c.l.bf16 %v31
  %v39 = vunpack.c.l.bf16 %v32
  %v40 = vunpack.c.l.bf16 %v33
  %v41 = vunpack.c.l.bf16 %v34
  %v42 = vunpack.c.l.bf16 %v35
  %v43 = vld [vmem:[%s1 + $0x4] sm:$0xf]
  %v44 = vld [vmem:[%s1 + $0x8] sm:$0xf]
  %v45 = vld [vmem:[%s1 + $0xc] sm:$0xf]
  %v46 = vld [vmem:[%s1 + $0x10] sm:$0xf]
  %v47 = vld [vmem:[%s1 + $0x14] sm:$0xf]
  %v48 = vld [vmem:[%s1 + $0x18] sm:$0xf]
  %v49 = vld [vmem:[%s1 + $0x1c] sm:$0xf]
  %v50 = vunpack.c.l.bf16 %v43
  %v51 = vunpack.c.l.bf16 %v44
  %v52 = vunpack.c.l.bf16 %v45
  %v53 = vunpack.c.l.bf16 %v46
  %v54 = vunpack.c.l.bf16 %v47
  %v55 = vunpack.c.l.bf16 %v48
  %v56 = vunpack.c.l.bf16 %v49
  %v57 = vadd.f32 %v36, %v50
  %v58 = vadd.f32 %v36, %v51
  %v59 = vadd.f32 %v36, %v52
  %v60 = vadd.f32 %v36, %v53
  %v61 = vadd.f32 %v36, %v54
  %v62 = vadd.f32 %v36, %v55
  %v63 = vadd.f32 %v36, %v56
  %v64 = vadd.f32 %v37, %v51
  %v65 = vadd.f32 %v37, %v52
  %v66 = vadd.f32 %v37, %v53
  %v67 = vadd.f32 %v37, %v54
  %v68 = vadd.f32 %v37, %v55
  %v69 = vadd.f32 %v37, %v56
  %v70 = vadd.f32 %v38, %v52
  %v71 = vadd.f32 %v38, %v53
  %v72 = vadd.f32 %v38, %v54
  %v73 = vadd.f32 %v38, %v55
  %v74 = vadd.f32 %v38, %v56
  %v75 = vadd.f32 %v39, %v53
  %v76 = vadd.f32 %v39, %v54
  %v77 = vadd.f32 %v39, %v55
  %v78 = vadd.f32 %v39, %v56
  %v79 = vadd.f32 %v40, %v54
  %v80 = vadd.f32 %v40, %v55
  %v81 = vadd.f32 %v40, %v56
  %v82 = vadd.f32 %v41, %v55
  %v83 = vadd.f32 %v41, %v56
  %v84 = vadd.f32 %v42, %v56
  %v85 = vld [vmem:[%s2] sm:$0x1]
  %v87 = vlaneseq
  %v88 = vshrl.u32 %v87, 7
  %v89 = vsub.s32 0, %v88
  %v90 = vrot.slane %v85, %v89
  %v92 = vadd.f32 %v57, %v90
  %v93 = vadd.f32 %v58, %v90
  %v94 = vadd.f32 %v59, %v90
  %v95 = vadd.f32 %v60, %v90
  %v96 = vadd.f32 %v61, %v90
  %v97 = vadd.f32 %v62, %v90
  %v98 = vadd.f32 %v63, %v90
  %v99 = vadd.f32 %v64, %v90
  %v100 = vadd.f32 %v65, %v90
  %v101 = vadd.f32 %v66, %v90
  %v102 = vadd.f32 %v67, %v90
  %v103 = vadd.f32 %v68, %v90
  %v104 = vadd.f32 %v69, %v90
  %v105 = vadd.f32 %v70, %v90
  %v106 = vadd.f32 %v71, %v90
  %v107 = vadd.f32 %v72, %v90
  %v108 = vadd.f32 %v73, %v90
  %v109 = vadd.f32 %v74, %v90
  %v110 = vadd.f32 %v75, %v90
  %v111 = vadd.f32 %v76, %v90
  %v112 = vadd.f32 %v77, %v90
  %v113 = vadd.f32 %v78, %v90
  %v114 = vadd.f32 %v79, %v90
  %v115 = vadd.f32 %v80, %v90
  %v116 = vadd.f32 %v81, %v90
  %v117 = vadd.f32 %v82, %v90
  %v118 = vadd.f32 %v83, %v90
  %v119 = vadd.f32 %v84, %v90
  %v120 = vmax.f32 %v92, 0.0
  %v121 = vmax.f32 %v93, 0.0
  %v122 = vmax.f32 %v94, 0.0
  %v123 = vmax.f32 %v95, 0.0
  %v124 = vmax.f32 %v96, 0.0
  %v125 = vmax.f32 %v97, 0.0
  %v126 = vmax.f32 %v98, 0.0
  %v127 = vmax.f32 %v99, 0.0
  %v128 = vmax.f32 %v100, 0.0
  %v129 = vmax.f32 %v101, 0.0
  %v130 = vmax.f32 %v102, 0.0
  %v131 = vmax.f32 %v103, 0.0
  %v132 = vmax.f32 %v104, 0.0
  %v133 = vmax.f32 %v105, 0.0
  %v134 = vmax.f32 %v106, 0.0
  %v135 = vmax.f32 %v107, 0.0
  %v136 = vmax.f32 %v108, 0.0
  %v137 = vmax.f32 %v109, 0.0
  %v138 = vmax.f32 %v110, 0.0
  %v139 = vmax.f32 %v111, 0.0
  %v140 = vmax.f32 %v112, 0.0
  %v141 = vmax.f32 %v113, 0.0
  %v142 = vmax.f32 %v114, 0.0
  %v143 = vmax.f32 %v115, 0.0
  %v144 = vmax.f32 %v116, 0.0
  %v145 = vmax.f32 %v117, 0.0
  %v146 = vmax.f32 %v118, 0.0
  %v147 = vmax.f32 %v119, 0.0
  %v148 = vld [vmem:[%s3] sm:$0xf]
  %v149 = vld [vmem:[%s3 + $0x4] sm:$0xf]
  %v150 = vld [vmem:[%s3 + $0x8] sm:$0xf]
  %v151 = vld [vmem:[%s3 + $0xc] sm:$0xf]
  %v152 = vld [vmem:[%s4] sm:$0x1]
  %v153 = vpack.c.bf16 %v121, %v120
  %v154 = vpack.c.bf16 %v123, %v122
  %v155 = vpack.c.bf16 %v125, %v124
  %v156 = vpack.c.bf16 %v127, %v126
  %v157 = vpack.c.bf16 %v129, %v128
  %v158 = vpack.c.bf16 %v131, %v130
  %v159 = vpack.c.bf16 %v133, %v132
  %v160 = vpack.c.bf16 %v135, %v134
  %v161 = vpack.c.bf16 %v137, %v136
  %v162 = vpack.c.bf16 %v139, %v138
  %v163 = vpack.c.bf16 %v141, %v140
  %v164 = vpack.c.bf16 %v143, %v142
  %v165 = vpack.c.bf16 %v145, %v144
  %v166 = vpack.c.bf16 %v147, %v146
  %v168 = vlaneseq
  %v169 = vshrl.u32 %v168, 7
  %v170 = vsub.s32 0, %v169
  %v171 = vrot.slane %v152, %v170
  %v177 = vunpack.c.l.b16 %v148
  %v178 = vunpack.c.l.b16 %v149
  %v179 = vunpack.c.l.b16 %v150
  %v180 = vunpack.c.l.b16 %v151
  %v181 = vpack.c.b16 %v178, %v177
  %v182 = vpack.c.b16 %v180, %v179
  %vm185 = vcmask 261120
  %v187 = vsel %vm185, %v153, 0
  %v190 = vsel %vm185, %v154, 0
  %v193 = vsel %vm185, %v155, 0
  %v196 = vsel %vm185, %v156, 0
  %v199 = vsel %vm185, %v157, 0
  %v202 = vsel %vm185, %v158, 0
  %v205 = vsel %vm185, %v159, 0
  %v208 = vsel %vm185, %v160, 0
  %v211 = vsel %vm185, %v161, 0
  %v214 = vsel %vm185, %v162, 0
  %v217 = vsel %vm185, %v163, 0
  %v220 = vsel %vm185, %v164, 0
  %v223 = vsel %vm185, %v165, 0
  %v226 = vsel %vm185, %v166, 0
  %228 = vmatprep.subr.bf16.mxu0 0
  %229 = vmatpush1.bf16.msra.mxu0 %v181
  %230 = vmatprep.subr.bf16.mxu0 0
  %231 = vmatpush1.bf16.msra.mxu0 %v182
  %232 = vmatprep.subr.bf16.mxu0 0
  %233 = vmatpush1.bf16.msra.mxu0 0
  %234 = vmatprep.subr.bf16.mxu0 0
  %235 = vmatpush1.bf16.msra.mxu0 0
  %236 = vmatprep.subr.bf16.mxu0 0
  %237 = vmatpush1.bf16.msra.mxu0 0
  %238 = vmatprep.subr.bf16.mxu0 0
  %239 = vmatpush1.bf16.msra.mxu0 0
  %240 = vmatprep.subr.bf16.mxu0 0
  %241 = vmatpush1.bf16.msra.mxu0 0
  %242 = vmatprep.subr.bf16.mxu0 0
  %243 = vmatpush1.bf16.msra.mxu0 0
  %244 = vmatprep.subr.bf16.mxu0 0
  %245 = vmatpush1.bf16.msra.mxu0 0
  %246 = vmatprep.subr.bf16.mxu0 0
  %247 = vmatpush1.bf16.msra.mxu0 0
  %248 = vmatprep.subr.bf16.mxu0 0
  %249 = vmatpush1.bf16.msra.mxu0 0
  %250 = vmatprep.subr.bf16.mxu0 0
  %251 = vmatpush1.bf16.msra.mxu0 0
  %252 = vmatprep.subr.bf16.mxu0 0
  %253 = vmatpush1.bf16.msra.mxu0 0
  %254 = vmatprep.subr.bf16.mxu0 0
  %255 = vmatpush1.bf16.msra.mxu0 0
  %256 = vmatprep.subr.bf16.mxu0 0
  %257 = vmatpush1.bf16.msra.mxu0 0
  %258 = vmatprep.subr.bf16.mxu0 0
  %259 = vmatpush1.bf16.msra.mxu0 0
  %260 = vmatprep.mubr.bf16.mxu0 0
  %261 = vmatmul.mubr.bf16.gmra.mrb[0].mxu0 %v187
  %v262 = vpop.f32.mrb[0].mxu0
  %v263 = vadd.f32 %v171, %v262
  %v264 = vpop.f32.mrb[0].mxu0
  %v265 = vpop.f32.mrb[0].mxu0
  %v266 = vadd.f32 %v171, %v265
  %v267 = vpop.f32.mrb[0].mxu0
  %268 = vmatprep.mubr.bf16.mxu0 0
  %269 = vmatmul.mubr.bf16.gmra.mrb[0].mxu0 %v190
  %v270 = vpop.f32.mrb[0].mxu0
  %v271 = vadd.f32 %v171, %v270
  %v272 = vpop.f32.mrb[0].mxu0
  %v273 = vpop.f32.mrb[0].mxu0
  %v274 = vadd.f32 %v171, %v273
  %v275 = vpop.f32.mrb[0].mxu0
  %276 = vmatprep.mubr.bf16.mxu0 0
  %277 = vmatmul.mubr.bf16.gmra.mrb[0].mxu0 %v193
  %v278 = vpop.f32.mrb[0].mxu0
  %v279 = vadd.f32 %v171, %v278
  %v280 = vpop.f32.mrb[0].mxu0
  %v281 = vpop.f32.mrb[0].mxu0
  %v282 = vadd.f32 %v171, %v281
  %v283 = vpop.f32.mrb[0].mxu0
  %284 = vmatprep.mubr.bf16.mxu0 0
  %285 = vmatmul.mubr.bf16.gmra.mrb[0].mxu0 %v196
  %v286 = vpop.f32.mrb[0].mxu0
  %v287 = vadd.f32 %v171, %v286
  %v288 = vpop.f32.mrb[0].mxu0
  %v289 = vpop.f32.mrb[0].mxu0
  %v290 = vadd.f32 %v171, %v289
  %v291 = vpop.f32.mrb[0].mxu0
  %292 = vmatprep.mubr.bf16.mxu0 0
  %293 = vmatmul.mubr.bf16.gmra.mrb[0].mxu0 %v199
  %v294 = vpop.f32.mrb[0].mxu0
  %v295 = vadd.f32 %v171, %v294
  %v296 = vpop.f32.mrb[0].mxu0
  %v297 = vpop.f32.mrb[0].mxu0
  %v298 = vadd.f32 %v171, %v297
  %v299 = vpop.f32.mrb[0].mxu0
  %300 = vmatprep.mubr.bf16.mxu0 0
  %301 = vmatmul.mubr.bf16.gmra.mrb[0].mxu0 %v202
  %v302 = vpop.f32.mrb[0].mxu0
  %v303 = vadd.f32 %v171, %v302
  %v304 = vpop.f32.mrb[0].mxu0
  %v305 = vpop.f32.mrb[0].mxu0
  %v306 = vadd.f32 %v171, %v305
  %v307 = vpop.f32.mrb[0].mxu0
  %308 = vmatprep.mubr.bf16.mxu0 0
  %309 = vmatmul.mubr.bf16.gmra.mrb[0].mxu0 %v205
  %v310 = vpop.f32.mrb[0].mxu0
  %v311 = vadd.f32 %v171, %v310
  %v312 = vpop.f32.mrb[0].mxu0
  %v313 = vpop.f32.mrb[0].mxu0
  %v314 = vadd.f32 %v171, %v313
  %v315 = vpop.f32.mrb[0].mxu0
  %316 = vmatprep.mubr.bf16.mxu0 0
  %317 = vmatmul.mubr.bf16.gmra.mrb[0].mxu0 %v208
  %v318 = vpop.f32.mrb[0].mxu0
  %v319 = vadd.f32 %v171, %v318
  %v320 = vpop.f32.mrb[0].mxu0
  %v321 = vpop.f32.mrb[0].mxu0
  %v322 = vadd.f32 %v171, %v321
  %v323 = vpop.f32.mrb[0].mxu0
  %324 = vmatprep.mubr.bf16.mxu0 0
  %325 = vmatmul.mubr.bf16.gmra.mrb[0].mxu0 %v211
  %v326 = vpop.f32.mrb[0].mxu0
  %v327 = vadd.f32 %v171, %v326
  %v328 = vpop.f32.mrb[0].mxu0
  %v329 = vpop.f32.mrb[0].mxu0
  %v330 = vadd.f32 %v171, %v329
  %v331 = vpop.f32.mrb[0].mxu0
  %332 = vmatprep.mubr.bf16.mxu0 0
  %333 = vmatmul.mubr.bf16.gmra.mrb[0].mxu0 %v214
  %v334 = vpop.f32.mrb[0].mxu0
  %v335 = vadd.f32 %v171, %v334
  %v336 = vpop.f32.mrb[0].mxu0
  %v337 = vpop.f32.mrb[0].mxu0
  %v338 = vadd.f32 %v171, %v337
  %v339 = vpop.f32.mrb[0].mxu0
  %340 = vmatprep.mubr.bf16.mxu0 0
  %341 = vmatmul.mubr.bf16.gmra.mrb[0].mxu0 %v217
  %v342 = vpop.f32.mrb[0].mxu0
  %v343 = vadd.f32 %v171, %v342
  %v344 = vpop.f32.mrb[0].mxu0
  %v345 = vpop.f32.mrb[0].mxu0
  %v346 = vadd.f32 %v171, %v345
  %v347 = vpop.f32.mrb[0].mxu0
  %348 = vmatprep.mubr.bf16.mxu0 0
  %349 = vmatmul.mubr.bf16.gmra.mrb[0].mxu0 %v220
  %v350 = vpop.f32.mrb[0].mxu0
  %v351 = vadd.f32 %v171, %v350
  %v352 = vpop.f32.mrb[0].mxu0
  %v353 = vpop.f32.mrb[0].mxu0
  %v354 = vadd.f32 %v171, %v353
  %v355 = vpop.f32.mrb[0].mxu0
  %356 = vmatprep.mubr.bf16.mxu0 0
  %357 = vmatmul.mubr.bf16.gmra.mrb[0].mxu0 %v223
  %v358 = vpop.f32.mrb[0].mxu0
  %v359 = vadd.f32 %v171, %v358
  %v360 = vpop.f32.mrb[0].mxu0
  %v361 = vpop.f32.mrb[0].mxu0
  %v362 = vadd.f32 %v171, %v361
  %v363 = vpop.f32.mrb[0].mxu0
  %364 = vmatprep.mubr.bf16.mxu0 0
  %365 = vmatmul.mubr.bf16.gmra.mrb[0].mxu0 %v226
  %v366 = vpop.f32.mrb[0].mxu0
  %v367 = vadd.f32 %v171, %v366
  %v368 = vpop.f32.mrb[0].mxu0
  %v369 = vpop.f32.mrb[0].mxu0
  %v370 = vadd.f32 %v171, %v369
  %v371 = vpop.f32.mrb[0].mxu0
  %372 = vdwg.mxu0
  %v373 = vmax.f32 %v263, 0.0
  %v374 = vmax.f32 %v266, 0.0
  %v375 = vmax.f32 %v271, 0.0
  %v376 = vmax.f32 %v274, 0.0
  %v377 = vmax.f32 %v279, 0.0
  %v378 = vmax.f32 %v282, 0.0
  %v379 = vmax.f32 %v287, 0.0
  %v380 = vmax.f32 %v290, 0.0
  %v381 = vmax.f32 %v295, 0.0
  %v382 = vmax.f32 %v298, 0.0
  %v383 = vmax.f32 %v303, 0.0
  %v384 = vmax.f32 %v306, 0.0
  %v385 = vmax.f32 %v311, 0.0
  %v386 = vmax.f32 %v314, 0.0
  %v387 = vmax.f32 %v319, 0.0
  %v388 = vmax.f32 %v322, 0.0
  %v389 = vmax.f32 %v327, 0.0
  %v390 = vmax.f32 %v330, 0.0
  %v391 = vmax.f32 %v335, 0.0
  %v392 = vmax.f32 %v338, 0.0
  %v393 = vmax.f32 %v343, 0.0
  %v394 = vmax.f32 %v346, 0.0
  %v395 = vmax.f32 %v351, 0.0
  %v396 = vmax.f32 %v354, 0.0
  %v397 = vmax.f32 %v359, 0.0
  %v398 = vmax.f32 %v362, 0.0
  %v399 = vmax.f32 %v367, 0.0
  %v400 = vmax.f32 %v370, 0.0
  %v401 = vld [vmem:[%s5] sm:$0x1]
  %v402 = vld [vmem:[#allocation2] sm:$0x1]
  %s403 = vtos %v402
  %v405 = vlaneseq
  %v406 = vshrl.u32 %v405, 7
  %v407 = vsub.s32 0, %v406
  %v408 = vrot.slane %v401, %v407
  %v410 = vmul.f32 %v373, %v408
  %v411 = vmul.f32 %v374, %v408
  %v412 = vmul.f32 %v375, %v408
  %v413 = vmul.f32 %v376, %v408
  %v414 = vmul.f32 %v377, %v408
  %v415 = vmul.f32 %v378, %v408
  %v416 = vmul.f32 %v379, %v408
  %v417 = vmul.f32 %v380, %v408
  %v418 = vmul.f32 %v381, %v408
  %v419 = vmul.f32 %v382, %v408
  %v420 = vmul.f32 %v383, %v408
  %v421 = vmul.f32 %v384, %v408
  %v422 = vmul.f32 %v385, %v408
  %v423 = vmul.f32 %v386, %v408
  %v424 = vmul.f32 %v387, %v408
  %v425 = vmul.f32 %v388, %v408
  %v426 = vmul.f32 %v389, %v408
  %v427 = vmul.f32 %v390, %v408
  %v428 = vmul.f32 %v391, %v408
  %v429 = vmul.f32 %v392, %v408
  %v430 = vmul.f32 %v393, %v408
  %v431 = vmul.f32 %v394, %v408
  %v432 = vmul.f32 %v395, %v408
  %v433 = vmul.f32 %v396, %v408
  %v434 = vmul.f32 %v397, %v408
  %v435 = vmul.f32 %v398, %v408
  %v436 = vmul.f32 %v399, %v408
  %v437 = vmul.f32 %v400, %v408
  %vm438 = vcmask 130048
  %v439 = vsel %vm438, %v410, 0.0
  %440 = vadd.xlane.f32.xlu0 %v439
  %v441 = vpop.xlane.xlu0 %440
  %v442 = vsel %vm438, %v411, 0.0
  %443 = vadd.xlane.f32.xlu0 %v442
  %v444 = vpop.xlane.xlu0 %443
  %v445 = vsel %vm438, %v412, 0.0
  %446 = vadd.xlane.f32.xlu0 %v445
  %v447 = vpop.xlane.xlu0 %446
  %v448 = vsel %vm438, %v413, 0.0
  %449 = vadd.xlane.f32.xlu0 %v448
  %v450 = vpop.xlane.xlu0 %449
  %v451 = vsel %vm438, %v414, 0.0
  %452 = vadd.xlane.f32.xlu0 %v451
  %v453 = vpop.xlane.xlu0 %452
  %v454 = vsel %vm438, %v415, 0.0
  %455 = vadd.xlane.f32.xlu0 %v454
  %v456 = vpop.xlane.xlu0 %455
  %v457 = vsel %vm438, %v416, 0.0
  %458 = vadd.xlane.f32.xlu0 %v457
  %v459 = vpop.xlane.xlu0 %458
  %v460 = vsel %vm438, %v417, 0.0
  %461 = vadd.xlane.f32.xlu0 %v460
  %v462 = vpop.xlane.xlu0 %461
  %v463 = vsel %vm438, %v418, 0.0
  %464 = vadd.xlane.f32.xlu0 %v463
  %v465 = vpop.xlane.xlu0 %464
  %v466 = vsel %vm438, %v419, 0.0
  %467 = vadd.xlane.f32.xlu0 %v466
  %v468 = vpop.xlane.xlu0 %467
  %v469 = vsel %vm438, %v420, 0.0
  %470 = vadd.xlane.f32.xlu0 %v469
  %v471 = vpop.xlane.xlu0 %470
  %v472 = vsel %vm438, %v421, 0.0
  %473 = vadd.xlane.f32.xlu0 %v472
  %v474 = vpop.xlane.xlu0 %473
  %v475 = vsel %vm438, %v422, 0.0
  %476 = vadd.xlane.f32.xlu0 %v475
  %v477 = vpop.xlane.xlu0 %476
  %v478 = vsel %vm438, %v423, 0.0
  %479 = vadd.xlane.f32.xlu0 %v478
  %v480 = vpop.xlane.xlu0 %479
  %v481 = vsel %vm438, %v424, 0.0
  %482 = vadd.xlane.f32.xlu0 %v481
  %v483 = vpop.xlane.xlu0 %482
  %v484 = vsel %vm438, %v425, 0.0
  %485 = vadd.xlane.f32.xlu0 %v484
  %v486 = vpop.xlane.xlu0 %485
  %v487 = vsel %vm438, %v426, 0.0
  %488 = vadd.xlane.f32.xlu0 %v487
  %v489 = vpop.xlane.xlu0 %488
  %v490 = vsel %vm438, %v427, 0.0
  %491 = vadd.xlane.f32.xlu0 %v490
  %v492 = vpop.xlane.xlu0 %491
  %v493 = vsel %vm438, %v428, 0.0
  %494 = vadd.xlane.f32.xlu0 %v493
  %v495 = vpop.xlane.xlu0 %494
  %v496 = vsel %vm438, %v429, 0.0
  %497 = vadd.xlane.f32.xlu0 %v496
  %v498 = vpop.xlane.xlu0 %497
  %v499 = vsel %vm438, %v430, 0.0
  %500 = vadd.xlane.f32.xlu0 %v499
  %v501 = vpop.xlane.xlu0 %500
  %v502 = vsel %vm438, %v431, 0.0
  %503 = vadd.xlane.f32.xlu0 %v502
  %v504 = vpop.xlane.xlu0 %503
  %v505 = vsel %vm438, %v432, 0.0
  %506 = vadd.xlane.f32.xlu0 %v505
  %v507 = vpop.xlane.xlu0 %506
  %v508 = vsel %vm438, %v433, 0.0
  %509 = vadd.xlane.f32.xlu0 %v508
  %v510 = vpop.xlane.xlu0 %509
  %v511 = vsel %vm438, %v434, 0.0
  %512 = vadd.xlane.f32.xlu0 %v511
  %v513 = vpop.xlane.xlu0 %512
  %v514 = vsel %vm438, %v435, 0.0
  %515 = vadd.xlane.f32.xlu0 %v514
  %v516 = vpop.xlane.xlu0 %515
  %v517 = vsel %vm438, %v436, 0.0
  %518 = vadd.xlane.f32.xlu0 %v517
  %v519 = vpop.xlane.xlu0 %518
  %v520 = vsel %vm438, %v437, 0.0
  %521 = vadd.xlane.f32.xlu0 %v520
  %v522 = vpop.xlane.xlu0 %521
  %v523 = vstv %s403
  %v524 = vadd.f32 %v441, %v523
  %v525 = vadd.f32 %v444, %v523
  %v526 = vadd.f32 %v447, %v523
  %v527 = vadd.f32 %v450, %v523
  %v528 = vadd.f32 %v453, %v523
  %v529 = vadd.f32 %v456, %v523
  %v530 = vadd.f32 %v459, %v523
  %v531 = vadd.f32 %v462, %v523
  %v532 = vadd.f32 %v465, %v523
  %v533 = vadd.f32 %v468, %v523
  %v534 = vadd.f32 %v471, %v523
  %v535 = vadd.f32 %v474, %v523
  %v536 = vadd.f32 %v477, %v523
  %v537 = vadd.f32 %v480, %v523
  %v538 = vadd.f32 %v483, %v523
  %v539 = vadd.f32 %v486, %v523
  %v540 = vadd.f32 %v489, %v523
  %v541 = vadd.f32 %v492, %v523
  %v542 = vadd.f32 %v495, %v523
  %v543 = vadd.f32 %v498, %v523
  %v544 = vadd.f32 %v501, %v523
  %v545 = vadd.f32 %v504, %v523
  %v546 = vadd.f32 %v507, %v523
  %v547 = vadd.f32 %v510, %v523
  %v548 = vadd.f32 %v513, %v523
  %v549 = vadd.f32 %v516, %v523
  %v550 = vadd.f32 %v519, %v523
  %v551 = vadd.f32 %v522, %v523
  %v580 = vlaneseq
  %v581 = vand.u32 %v580, 127
  %v582 = vlaneseq
  %v583 = vshrl.u32 %v582, 7
  %v584 = vsub.s32 %v581, %v583
  %v585 = vrot.slane %v524, %v584
  %v586 = vlaneseq
  %v587 = vshrl.u32 %v586, 7
  %v588 = vsub.s32 %v581, %v587
  %v589 = vrot.slane %v525, %v588
  %v590 = vlaneseq
  %v591 = vshrl.u32 %v590, 7
  %v592 = vsub.s32 %v581, %v591
  %v593 = vrot.slane %v526, %v592
  %v594 = vlaneseq
  %v595 = vshrl.u32 %v594, 7
  %v596 = vsub.s32 %v581, %v595
  %v597 = vrot.slane %v527, %v596
  %v598 = vlaneseq
  %v599 = vshrl.u32 %v598, 7
  %v600 = vsub.s32 %v581, %v599
  %v601 = vrot.slane %v528, %v600
  %v602 = vlaneseq
  %v603 = vshrl.u32 %v602, 7
  %v604 = vsub.s32 %v581, %v603
  %v605 = vrot.slane %v529, %v604
  %v606 = vlaneseq
  %v607 = vshrl.u32 %v606, 7
  %v608 = vsub.s32 %v581, %v607
  %v609 = vrot.slane %v530, %v608
  %v610 = vlaneseq
  %v611 = vshrl.u32 %v610, 7
  %v612 = vsub.s32 %v581, %v611
  %v613 = vrot.slane %v531, %v612
  %v614 = vlaneseq
  %v615 = vshrl.u32 %v614, 7
  %v616 = vsub.s32 %v581, %v615
  %v617 = vrot.slane %v532, %v616
  %v618 = vlaneseq
  %v619 = vshrl.u32 %v618, 7
  %v620 = vsub.s32 %v581, %v619
  %v621 = vrot.slane %v533, %v620
  %v622 = vlaneseq
  %v623 = vshrl.u32 %v622, 7
  %v624 = vsub.s32 %v581, %v623
  %v625 = vrot.slane %v534, %v624
  %v626 = vlaneseq
  %v627 = vshrl.u32 %v626, 7
  %v628 = vsub.s32 %v581, %v627
  %v629 = vrot.slane %v535, %v628
  %v630 = vlaneseq
  %v631 = vshrl.u32 %v630, 7
  %v632 = vsub.s32 %v581, %v631
  %v633 = vrot.slane %v536, %v632
  %v634 = vlaneseq
  %v635 = vshrl.u32 %v634, 7
  %v636 = vsub.s32 %v581, %v635
  %v637 = vrot.slane %v537, %v636
  %v638 = vlaneseq
  %v639 = vshrl.u32 %v638, 7
  %v640 = vsub.s32 %v581, %v639
  %v641 = vrot.slane %v538, %v640
  %v642 = vlaneseq
  %v643 = vshrl.u32 %v642, 7
  %v644 = vsub.s32 %v581, %v643
  %v645 = vrot.slane %v539, %v644
  %v646 = vlaneseq
  %v647 = vshrl.u32 %v646, 7
  %v648 = vsub.s32 %v581, %v647
  %v649 = vrot.slane %v540, %v648
  %v650 = vlaneseq
  %v651 = vshrl.u32 %v650, 7
  %v652 = vsub.s32 %v581, %v651
  %v653 = vrot.slane %v541, %v652
  %v654 = vlaneseq
  %v655 = vshrl.u32 %v654, 7
  %v656 = vsub.s32 %v581, %v655
  %v657 = vrot.slane %v542, %v656
  %v658 = vlaneseq
  %v659 = vshrl.u32 %v658, 7
  %v660 = vsub.s32 %v581, %v659
  %v661 = vrot.slane %v543, %v660
  %v662 = vlaneseq
  %v663 = vshrl.u32 %v662, 7
  %v664 = vsub.s32 %v581, %v663
  %v665 = vrot.slane %v544, %v664
  %v666 = vlaneseq
  %v667 = vshrl.u32 %v666, 7
  %v668 = vsub.s32 %v581, %v667
  %v669 = vrot.slane %v545, %v668
  %v670 = vlaneseq
  %v671 = vshrl.u32 %v670, 7
  %v672 = vsub.s32 %v581, %v671
  %v673 = vrot.slane %v546, %v672
  %v674 = vlaneseq
  %v675 = vshrl.u32 %v674, 7
  %v676 = vsub.s32 %v581, %v675
  %v677 = vrot.slane %v547, %v676
  %v678 = vlaneseq
  %v679 = vshrl.u32 %v678, 7
  %v680 = vsub.s32 %v581, %v679
  %v681 = vrot.slane %v548, %v680
  %v682 = vlaneseq
  %v683 = vshrl.u32 %v682, 7
  %v684 = vsub.s32 %v581, %v683
  %v685 = vrot.slane %v549, %v684
  %v686 = vlaneseq
  %v687 = vshrl.u32 %v686, 7
  %v688 = vsub.s32 %v581, %v687
  %v689 = vrot.slane %v550, %v688
  %v690 = vlaneseq
  %v691 = vshrl.u32 %v690, 7
  %v692 = vsub.s32 %v581, %v691
  %v693 = vrot.slane %v551, %v692
  %vm694 = vcmask 1041409
  %v695 = vsel %vm694, %v589, %v585
  %vm696 = vcmask 1042434
  %v697 = vsel %vm696, %v593, %v695
  %vm698 = vcmask 1043459
  %v699 = vsel %vm698, %v597, %v697
  %vm700 = vcmask 1044484
  %v701 = vsel %vm700, %v601, %v699
  %vm702 = vcmask 1045509
  %v703 = vsel %vm702, %v605, %v701
  %vm704 = vcmask 1046534
  %v705 = vsel %vm704, %v609, %v703
  %vm706 = vcmask 1047559
  %v707 = vsel %vm706, %v613, %v705
  %v708 = vsel %vm694, %v621, %v617
  %v709 = vsel %vm696, %v625, %v708
  %v710 = vsel %vm698, %v629, %v709
  %v711 = vsel %vm700, %v633, %v710
  %v712 = vsel %vm702, %v637, %v711
  %v713 = vsel %vm704, %v641, %v712
  %v714 = vsel %vm706, %v645, %v713
  %v715 = vsel %vm694, %v653, %v649
  %v716 = vsel %vm696, %v657, %v715
  %v717 = vsel %vm698, %v661, %v716
  %v718 = vsel %vm700, %v665, %v717
  %v719 = vsel %vm702, %v669, %v718
  %v720 = vsel %vm704, %v673, %v719
  %v721 = vsel %vm706, %v677, %v720
  %v722 = vsel %vm694, %v685, %v681
  %v723 = vsel %vm696, %v689, %v722
  %v724 = vsel %vm698, %v693, %v723
  %vm729 = vcmask 64512
  %730 = vst.msk [vmem:[%s7] sm:$0xff] %vm729, %v707
  %731 = vst.msk [vmem:[%s7 + $0x8] sm:$0xff] %vm729, %v714
  %732 = vst.msk [vmem:[%s7 + $0x10] sm:$0xff] %vm729, %v721
  %vm733 = vcmask 60416
  %734 = vst.msk [vmem:[%s7 + $0x18] sm:$0xf] %vm733, %v724
  // Predicated region
  $region30: #{feature_interaction_detector.1} parent=0 // pred_check
    _
  $region31: #{feature_interaction_detector.1} parent=0 // pred_check_branch
    %736 = sbr.rel (0) target = $region33
  $region32: #{feature_interaction_detector.1} parent=0 // pred_region
    _
  $region33: #{feature_interaction_detector.1} parent=0 // pred_fallthru
    _
  // Predicated region
  $region34: #{feature_interaction_detector.1} parent=0 // pred_check
    _
  $region35: #{feature_interaction_detector.1} parent=0 // pred_check_branch
    %738 = sbr.rel (0) target = $region37
  $region36: #{feature_interaction_detector.1} parent=0 // pred_region
    _
  $region37: #{feature_interaction_detector.1} parent=0 // pred_fallthru
    _

</llo_original>
